<compile_context>
chip_gen: v5e
topology: v5e:2x2
jax: 0.10.0
libtpu: 0.0.40
codegen_flags: <defaults>
</compile_context>

<pallas_src>
import numpy as np
import jax
import jax.numpy as jnp
from jax.experimental import pallas as pl
from jax.experimental.pallas import tpu as pltpu

_FREQ_MAP = {"h": 4, "t": 5, "s": 6, "m": 1, "a": 1, "w": 2, "d": 3, "b": 3}
_K_PAD = 8  # contraction dim padded to one sublane group (zeros -> exact)


def _round_up(x, m):
    return ((x + m - 1) // m) * m


def _time_feature_embed_kernel(x_ref, w_ref, b_ref, o_ref):
    # x_ref: [TILE, K_PAD]    f32 time features (zero-padded contraction dim)
    # w_ref: [K_PAD, d_model] f32 weight (VMEM-resident, constant index_map)
    # b_ref: [1, d_model]     f32 bias   (VMEM-resident)
    # o_ref: [TILE, d_model]  f32 output (written at true d_model width)
    o_ref[...] = (
        jnp.dot(
            x_ref[...],
            w_ref[...],
            preferred_element_type=jnp.float32,
            precision=jax.lax.Precision.HIGHEST,  # exact f32 multi-pass on MXU
        )
        + b_ref[...]
    )


class TimeFeatureEmbeddingPallas:
    """JAX/Pallas port of TimeFeatureEmbedding (a Linear d_inp -> d_model)."""

    def __init__(self, d_model, embed_type="timeF", freq="h", seed=42):
        del embed_type  # 'timeF' is the only variant for this module
        self.d_model = d_model
        self.d_inp = _FREQ_MAP[freq]

        # nn.Linear default init: U(-1/sqrt(fan_in), 1/sqrt(fan_in)); weight
        # stored transposed ([d_inp, d_model]) and zero-padded to K_PAD rows.
        rng = np.random.RandomState(seed)
        bound = 1.0 / np.sqrt(self.d_inp)
        w = rng.uniform(-bound, bound, size=(self.d_inp, d_model)).astype(np.float32)
        b = rng.uniform(-bound, bound, size=(d_model,)).astype(np.float32)
        w_pad = np.zeros((_K_PAD, d_model), np.float32)
        w_pad[: self.d_inp, :] = w
        self.w = jnp.asarray(w_pad)                   # [K_PAD, d_model]
        self.b = jnp.asarray(b.reshape(1, d_model))   # [1, d_model]

    def _pick_tile(self, bl, *, max_tile=2048, vmem_budget=24 * 1024 * 1024):
        # Double-buffered footprint per token row:
        #   2 output buffers (d_model f32 lanes) + 2 input buffers
        #   (K_PAD lanes, padded to 128 lanes in VMEM layout).
        per_row_bytes = 2 * 4 * (self.d_model + 128)
        cap = max(8, (vmem_budget // per_row_bytes) // 8 * 8)
        tile = min(max_tile, cap, _round_up(bl, 8))
        if bl >= 16 and tile >= bl:
            # Guarantee >=2 grid steps so both v7x TensorCores get work.
            tile = _round_up((bl + 1) // 2, 8)
        return tile

    def __call__(self, x):
        # x: float array [B, L, d_inp] of time-feature values
        x = x.astype(jnp.float32)
        B, L, F = x.shape
        assert F == self.d_inp, f"expected {self.d_inp} time features, got {F}"
        BL = B * L
        x2 = x.reshape(BL, F)
        # Zero-pad contraction dim to 8: clean MXU shape, exact result, and
        # negligible traffic compared to the d_model-wide output.
        x2 = jnp.pad(x2, ((0, 0), (0, _K_PAD - F)))

        tile = self._pick_tile(BL)
        grid = (pl.cdiv(BL, tile),)

        out = pl.pallas_call(
            _time_feature_embed_kernel,
            out_shape=jax.ShapeDtypeStruct((BL, self.d_model), jnp.float32),
            grid=grid,
            in_specs=[
                pl.BlockSpec((tile, _K_PAD), lambda i: (i, 0)),            # x tile
                pl.BlockSpec((_K_PAD, self.d_model), lambda i: (0, 0)),    # weight (resident)
                pl.BlockSpec((1, self.d_model), lambda i: (0, 0)),         # bias (resident)
            ],
            out_specs=pl.BlockSpec((tile, self.d_model), lambda i: (i, 0)),
            compiler_params=pltpu.CompilerParams(
                dimension_semantics=("parallel",),        # shards steps on v7x's 2 TCs
                vmem_limit_bytes=32 * 1024 * 1024,        # fits v5e/v6e/v7x scoped budgets
            ),
            cost_estimate=pl.CostEstimate(
                flops=2 * BL * self.d_inp * self.d_model,
                bytes_accessed=4 * (BL * _K_PAD + BL * self.d_model
                                    + _K_PAD * self.d_model + self.d_model),
                transcendentals=0,
            ),
        )(x2, self.w, self.b)

        return out.reshape(B, L, self.d_model)

    def reference(self, x):
        """Plain-JAX reference (exact linear layer), for validation."""
        x = x.astype(jnp.float32)
        w = self.w[: self.d_inp, :]
        b = self.b[0]
        return jnp.einsum("bld,dk->blk", x, w,
                          precision=jax.lax.Precision.HIGHEST) + b


if __name__ == "__main__":
    key = jax.random.PRNGKey(0)
    B, L, d_model, freq = 2, 8, 32, "h"
    d_inp = _FREQ_MAP[freq]

    # synthetic normalized time features in [-0.5, 0.5], as produced upstream
    x = jax.random.uniform(key, (B, L, d_inp), jnp.float32, minval=-0.5, maxval=0.5)

    mod = TimeFeatureEmbeddingPallas(d_model, embed_type="timeF", freq=freq)
    out = mod(x)
    jax.block_until_ready(out)

    ref = mod.reference(x)
    assert out.shape == (B, L, d_model)
    # HIGHEST-precision MXU f32 matmul is exact to ~1e-6; 1e-4 gives headroom
    # while still catching any real indexing/bias bug.
    assert jnp.allclose(out, ref, atol=1e-4), "mismatch vs reference"
    print("KERNEL_OK")
</pallas_src>

<mosaic_0001>
module attributes {stable_mosaic.version = 11 : i64} {
  func.func @_time_feature_embed_kernel(%arg0: i32, %arg1: memref<8x8xf32, #tpu.memory_space<vmem>>, %arg2: memref<8x32xf32, #tpu.memory_space<vmem>>, %arg3: memref<1x32xf32, #tpu.memory_space<vmem>>, %arg4: memref<8x32xf32, #tpu.memory_space<vmem>>) attributes {dimension_semantics = [#tpu.dimension_semantics<parallel>], iteration_bounds = array<i64: 2>, scalar_prefetch = 0 : i64, scratch_operands = 0 : i64, tpu.core_type = #tpu.core_type<tc>, window_params = [{transform_indices = @transform_0, window_bounds = array<i64: 8, 8>}, {pipeline_mode = #tpu.pipeline_mode<synchronous>, transform_indices = @transform_1, window_bounds = array<i64: 8, 32>}, {pipeline_mode = #tpu.pipeline_mode<synchronous>, transform_indices = @transform_2, window_bounds = array<i64: 1, 32>}, {transform_indices = @transform_3, window_bounds = array<i64: 8, 32>}]} {
    %c0 = arith.constant 0 : index
    %c0_0 = arith.constant 0 : index
    %0 = vector.load %arg1[%c0, %c0_0] : memref<8x8xf32, #tpu.memory_space<vmem>>, vector<8x8xf32>
    %c0_1 = arith.constant 0 : index
    %c0_2 = arith.constant 0 : index
    %1 = vector.load %arg2[%c0_1, %c0_2] : memref<8x32xf32, #tpu.memory_space<vmem>>, vector<8x32xf32>
    %cst = arith.constant dense<0.000000e+00> : vector<8x32xf32>
    %2 = tpu.matmul %0, %1, %cst {dimension_numbers = #tpu.dot_dimension_numbers<[1], [0], [0], [1], [0, 0, 1, 1], [], []>, precision = #tpu.contract_precision<fp32>} : vector<8x8xf32>, vector<8x32xf32>, vector<8x32xf32> -> vector<8x32xf32>
    %c0_3 = arith.constant 0 : index
    %c0_4 = arith.constant 0 : index
    %3 = vector.load %arg3[%c0_3, %c0_4] : memref<1x32xf32, #tpu.memory_space<vmem>>, vector<1x32xf32>
    %4 = vector.broadcast %3 : vector<1x32xf32> to vector<8x32xf32>
    %5 = arith.addf %2, %4 : vector<8x32xf32>
    %c0_5 = arith.constant 0 : index
    %c0_6 = arith.constant 0 : index
    %6 = vector.load %arg4[%c0_5, %c0_6] : memref<8x32xf32, #tpu.memory_space<vmem>>, vector<8x32xf32>
    tpu.vector_store %arg4[%c0_5, %c0_6], %5 {strides = array<i32>} : memref<8x32xf32, #tpu.memory_space<vmem>>, vector<8x32xf32>,
    return
  }
  func.func @transform_0(%arg0: i32) -> (i32, i32) {
    %c0_i32 = arith.constant 0 : i32
    %c0_i32_0 = arith.constant 0 : i32
    return %arg0, %c0_i32 : i32, i32
  }
  func.func @transform_1(%arg0: i32) -> (i32, i32) {
    %c0_i32 = arith.constant 0 : i32
    %c0_i32_0 = arith.constant 0 : i32
    %c0_i32_1 = arith.constant 0 : i32
    return %c0_i32, %c0_i32_0 : i32, i32
  }
  func.func @transform_2(%arg0: i32) -> (i32, i32) {
    %c0_i32 = arith.constant 0 : i32
    %c0_i32_0 = arith.constant 0 : i32
    %c0_i32_1 = arith.constant 0 : i32
    return %c0_i32, %c0_i32_0 : i32, i32
  }
  func.func @transform_3(%arg0: i32) -> (i32, i32) {
    %c0_i32 = arith.constant 0 : i32
    %c0_i32_0 = arith.constant 0 : i32
    return %arg0, %c0_i32 : i32, i32
  }
}

</mosaic_0001>

<llo_original>
// kernel: tpu_custom_call.1
$region0: #{tpu_custom_call.1}
  #allocation0 [shape = 'u32[]', space=smem, size = 0x4, offset = 0x4, fixed_abs, tag = 'smem constant byte address 0x4 - core index']
  #allocation1 [shape = 'u32[72,128]{1,0:T(1,128)}', space=vmem, size = 0x9000, scoped, tag = 'internal scratch']
  %s0 = inlined_call_operand.vmem [shape: f32[16,8], index: 0, kind: input, shape index: {}]
  %s1 = inlined_call_operand.vmem [shape: f32[8,32], index: 1, kind: input, shape index: {}]
  %s2 = inlined_call_operand.vmem [shape: f32[1,32], index: 2, kind: input, shape index: {}]
  %s3 = inlined_call_operand.hbm [shape: f32[16,32], index: 3, kind: output, shape index: {}]
  %s4 = sld [smem:[#allocation0]]
  $region45: #{tpu_custom_call.1} parent=0
    _
  %s6 = ssub.s32 1, %s4
  %s7 = scalar_select 0, %s6, %s4
  $region1: #{tpu_custom_call.1} parent=0
    #allocation2 [shape = 'u8[8192]{0}', space=vmem, size = 0x2000, scoped, tag = 'output window, operand 0']
    #allocation3 [shape = 's32[2]{0}', space=sflag, size = 0x8, scoped, tag = 'scoped memory for tpu_custom_call.1']
    %8 = vsyncpa [#allocation3], 0
    %s9 = scalar_lea.sflag [#allocation3], 1
    %10 = vsyncpa %s9, 0
    loop: start=0, step=1, limit=4
    $region2: #{tpu_custom_call.1} parent=1 // loop_pre_header
      _
    $region3: #{tpu_custom_call.1} parent=1 // loop_header
      %s12 = sphi 0, %s16
      %p13 = scmp.ge.s32.totalorder %s12, 4
      %s22 = sphi 0, %s24
      %s25 = sphi 0, %s22
      %s26 = sphi 0, %s25
      %s42 = sphi 0, %s26
      %s46 = sphi 0, %s46
      %s48 = sphi 0, %s46
      %s49 = sphi 0, %s48
      %s63 = sphi 0, %s49
      %s67 = sphi 0, %s67
      %s69 = sphi 0, %s67
      %s70 = sphi 0, %s69
      %s84 = sphi 0, %s70
      %s90 = sphi 0, %s92
      %s93 = sphi 0, %s90
      %s94 = sphi 0, %s93
      %s110 = sphi 0, %s94
    $region4: #{tpu_custom_call.1} parent=1 // loop_header_branch
      %15 = sbr.rel (%p13) target = $region8
    $region5: #{tpu_custom_call.1} parent=1 // loop_body
      %s17 = ssub.s32 %s12, 1
      %s18 = ssub.s32 %s12, 2
      %s19 = sadd.s32 %s12, 1
      %s20 = ssub.s32 %s12, %s19
      %p21 = scmp.eq.s32.totalorder %s20, 0
      %s23 = sadd.s32 %s22, 1
      %s24 = scalar_select %p21, %s22, %s23
      %p27 = pneg %p21
      %p28 = scmp.eq.s32.totalorder %s12, 1
      %p29 = por %p27, %p28
      %p30 = scmp.ne.s32.totalorder %s22, %s25
      %p31 = scmp.eq.s32.totalorder %s12, 0
      %p32 = por %p30, %p31
      %p33 = scmp.ne.s32.totalorder %s22, %s25
      %p34 = scmp.eq.s32.totalorder %s17, 1
      %p35 = por %p33, %p34
      %p36 = scmp.ne.s32.totalorder %s25, %s26
      %p37 = scmp.eq.s32.totalorder %s17, 0
      %p38 = por %p36, %p37
      %p39 = scmp.ne.s32.totalorder %s25, %s26
      %p40 = scmp.eq.s32.totalorder %s18, 1
      %p41 = por %p39, %p40
      %p43 = scmp.ne.s32.totalorder %s26, %s42
      %p44 = scmp.eq.s32.totalorder %s18, 0
      %p45 = por %p43, %p44
      %s47 = sadd.s32 %s46, 1
      %p50 = scmp.eq.s32.totalorder %s12, 1
      %p51 = scmp.ne.s32.totalorder %s46, %s48
      %p52 = scmp.eq.s32.totalorder %s12, 0
      %p53 = por %p51, %p52
      %p54 = scmp.ne.s32.totalorder %s46, %s48
      %p55 = scmp.eq.s32.totalorder %s17, 1
      %p56 = por %p54, %p55
      %p57 = scmp.ne.s32.totalorder %s48, %s49
      %p58 = scmp.eq.s32.totalorder %s17, 0
      %p59 = por %p57, %p58
      %p60 = scmp.ne.s32.totalorder %s48, %s49
      %p61 = scmp.eq.s32.totalorder %s18, 1
      %p62 = por %p60, %p61
      %p64 = scmp.ne.s32.totalorder %s49, %s63
      %p65 = scmp.eq.s32.totalorder %s18, 0
      %p66 = por %p64, %p65
      %s68 = sadd.s32 %s67, 1
      %p71 = scmp.eq.s32.totalorder %s12, 1
      %p72 = scmp.ne.s32.totalorder %s67, %s69
      %p73 = scmp.eq.s32.totalorder %s12, 0
      %p74 = por %p72, %p73
      %p75 = scmp.ne.s32.totalorder %s67, %s69
      %p76 = scmp.eq.s32.totalorder %s17, 1
      %p77 = por %p75, %p76
      %p78 = scmp.ne.s32.totalorder %s69, %s70
      %p79 = scmp.eq.s32.totalorder %s17, 0
      %p80 = por %p78, %p79
      %p81 = scmp.ne.s32.totalorder %s69, %s70
      %p82 = scmp.eq.s32.totalorder %s18, 1
      %p83 = por %p81, %p82
      %p85 = scmp.ne.s32.totalorder %s70, %s84
      %p86 = scmp.eq.s32.totalorder %s18, 0
      %p87 = por %p85, %p86
      %s88 = ssub.s32 %s12, %s19
      %p89 = scmp.eq.s32.totalorder %s88, 0
      %s91 = sadd.s32 %s90, 1
      %s92 = scalar_select %p89, %s90, %s91
      %p95 = pneg %p89
      %p96 = scmp.eq.s32.totalorder %s12, 1
      %p97 = por %p95, %p96
      %p98 = scmp.ne.s32.totalorder %s90, %s93
      %p99 = scmp.eq.s32.totalorder %s12, 0
      %p100 = por %p98, %p99
      %p101 = scmp.ne.s32.totalorder %s90, %s93
      %p102 = scmp.eq.s32.totalorder %s17, 1
      %p103 = por %p101, %p102
      %p104 = scmp.ne.s32.totalorder %s93, %s94
      %p105 = scmp.eq.s32.totalorder %s17, 0
      %p106 = por %p104, %p105
      %p107 = scmp.ne.s32.totalorder %s93, %s94
      %p108 = scmp.eq.s32.totalorder %s18, 1
      %p109 = por %p107, %p108
      %p111 = scmp.ne.s32.totalorder %s94, %s110
      %p112 = scmp.eq.s32.totalorder %s18, 0
      %p113 = por %p111, %p112
      %p114 = scmp.le.s32.totalorder 1, %s12
      %p115 = scmp.lt.s32.totalorder %s12, 3
      %p116 = pnand %p114, %p115
      %p117 = pneg %p116
      // Predicated region
      $region9: #{tpu_custom_call.1} parent=5 // pred_check
        _
      $region10: #{tpu_custom_call.1} parent=5 // pred_check_branch
        %119 = sbr.rel (%p116) target = $region12
      $region11: #{tpu_custom_call.1} parent=5 // pred_region
        %s120 = ssub.s32 %s12, 1
        // Predicated region
        $region13: #{tpu_custom_call.1} parent=11 // pred_check
          %p121 = pneg %p59
        $region14: #{tpu_custom_call.1} parent=11 // pred_check_branch
          %123 = sbr.rel (%p121) target = $region16
        $region15: #{tpu_custom_call.1} parent=11 // pred_region
          _
        $region16: #{tpu_custom_call.1} parent=11 // pred_fallthru
          _
        // Predicated region
        $region17: #{tpu_custom_call.1} parent=11 // pred_check
          %p124 = pneg %p80
        $region18: #{tpu_custom_call.1} parent=11 // pred_check_branch
          %126 = sbr.rel (%p124) target = $region20
        $region19: #{tpu_custom_call.1} parent=11 // pred_region
          _
        $region20: #{tpu_custom_call.1} parent=11 // pred_fallthru
          _
      $region12: #{tpu_custom_call.1} parent=5 // pred_fallthru
        _
      %p127 = scmp.lt.s32.totalorder %s12, 2
      // Predicated region
      $region21: #{tpu_custom_call.1} parent=5 // pred_check
        %p128 = pneg %p127
      $region22: #{tpu_custom_call.1} parent=5 // pred_check_branch
        %130 = sbr.rel (%p128) target = $region24
      $region23: #{tpu_custom_call.1} parent=5 // pred_region
        // Predicated region
        $region25: #{tpu_custom_call.1} parent=23 // pred_check
          %p131 = pneg %p32
        $region26: #{tpu_custom_call.1} parent=23 // pred_check_branch
          %133 = sbr.rel (%p131) target = $region28
        $region27: #{tpu_custom_call.1} parent=23 // pred_region
          %p134 = scmp.lt.s32.totalorder %s12, 1
          %s135 = scalar_select %p134, %s12, 1
          %s136 = smul.addr %s135, 8
          %s137 = scalar_lea.vmem %s0, %s136
        $region28: #{tpu_custom_call.1} parent=23 // pred_fallthru
          _
      $region24: #{tpu_custom_call.1} parent=5 // pred_fallthru
        _
      %p138 = scmp.le.s32.totalorder 1, %s12
      %p139 = scmp.lt.s32.totalorder %s12, 3
      %p140 = pnand %p138, %p139
      %p141 = pneg %p140
      // Predicated region
      $region29: #{tpu_custom_call.1} parent=5 // pred_check
        _
      $region30: #{tpu_custom_call.1} parent=5 // pred_check_branch
        %143 = sbr.rel (%p140) target = $region32
      $region31: #{tpu_custom_call.1} parent=5 // pred_region
        %s144 = ssub.s32 %s12, 1
        %p145 = scmp.lt.s32.totalorder %s17, 1
        %s146 = scalar_select %p145, %s17, 1
        %s147 = smul.addr %s146, 8
        %s148 = scalar_lea.vmem %s0, %s147
        %p149 = pneg %p38
        %p150 = pneg %p35
        %p151 = pneg %p59
        %p152 = pneg %p56
        %p153 = pneg %p80
        %p154 = pneg %p77
        %p155 = pneg %p106
        %p156 = pneg %p103
        %s157 = sand.u32 %s93, 1
        %s158 = scalar_lea.sflag [#allocation3], %s157
        %s159 = sand.u32 %s93, 1
        %s160 = smul.addr %s159, 8
        %s161 = scalar_lea.vmem [#allocation2], %s160
        %p162 = scmp.lt.s32.totalorder %s17, 1
        %s163 = scalar_select %p162, %s17, 1
        %s164 = smul.addr %s163, 8
        %s165 = scalar_lea.vmem %s0, %s164
        %v166 = vld [vmem:[%s165] sm:$0xff]
        %v167 = vld [vmem:[%s1] sm:$0xff]
        %v168 = vld [vmem:[%s2] sm:$0x1]
        %v170 = vperm.slane %v168, 0
        %vm172 = vcmask 64512
        %v174 = vsel %vm172, %v166, 0
        %176 = vmatpush.msra.mxu0 0.0
        %177 = vmatpush.msra.mxu0 0.0
        %178 = vmatpush.msra.mxu0 0.0
        %179 = vmatpush.msra.mxu0 0.0
        %180 = vmatpush.msra.mxu0 0.0
        %181 = vmatpush.msra.mxu0 0.0
        %182 = vmatpush.msra.mxu0 0.0
        %183 = vmatpush.msra.mxu0 0.0
        %184 = vmatpush.msra.mxu0 0.0
        %185 = vmatpush.msra.mxu0 0.0
        %186 = vmatpush.msra.mxu0 0.0
        %187 = vmatpush.msra.mxu0 0.0
        %188 = vmatpush.msra.mxu0 0.0
        %189 = vmatpush.msra.mxu0 0.0
        %190 = vmatpush.msra.mxu0 0.0
        %v191 = vand.u32 %v167, 4294901760
        %192 = vmatpush.msra.mxu0 %v191
        %v193 = vand.u32 %v174, 4294901760
        %v194 = vsub.f32 %v174, %v193
        %v195 = vand.u32 %v194, 4294901760
        %v196 = vsub.f32 %v194, %v195
        %v197 = vand.u32 %v196, 4294901760
        %198 = vmatmul.f32.gmra.mxu0 %v197
        %v199 = vpop.f32.mrf.mxu0
        %v200 = vadd.f32 %v170, %v199
        %201 = vdwg.mxu0
        %202 = vmatpush.msra.mxu0 0.0
        %203 = vmatpush.msra.mxu0 0.0
        %204 = vmatpush.msra.mxu0 0.0
        %205 = vmatpush.msra.mxu0 0.0
        %206 = vmatpush.msra.mxu0 0.0
        %207 = vmatpush.msra.mxu0 0.0
        %208 = vmatpush.msra.mxu0 0.0
        %209 = vmatpush.msra.mxu0 0.0
        %210 = vmatpush.msra.mxu0 0.0
        %211 = vmatpush.msra.mxu0 0.0
        %212 = vmatpush.msra.mxu0 0.0
        %213 = vmatpush.msra.mxu0 0.0
        %214 = vmatpush.msra.mxu0 0.0
        %215 = vmatpush.msra.mxu0 0.0
        %216 = vmatpush.msra.mxu0 0.0
        %v217 = vand.u32 %v167, 4294901760
        %v218 = vsub.f32 %v167, %v217
        %v219 = vand.u32 %v218, 4294901760
        %v220 = vsub.f32 %v218, %v219
        %v221 = vand.u32 %v220, 4294901760
        %222 = vmatpush.msra.mxu0 %v221
        %v223 = vand.u32 %v174, 4294901760
        %224 = vmatmul.f32.gmra.mxu0 %v223
        %v225 = vpop.f32.mrf.mxu0
        %v226 = vadd.f32 %v200, %v225
        %227 = vdwg.mxu0
        %228 = vmatpush.msra.mxu0 0.0
        %229 = vmatpush.msra.mxu0 0.0
        %230 = vmatpush.msra.mxu0 0.0
        %231 = vmatpush.msra.mxu0 0.0
        %232 = vmatpush.msra.mxu0 0.0
        %233 = vmatpush.msra.mxu0 0.0
        %234 = vmatpush.msra.mxu0 0.0
        %235 = vmatpush.msra.mxu0 0.0
        %236 = vmatpush.msra.mxu0 0.0
        %237 = vmatpush.msra.mxu0 0.0
        %238 = vmatpush.msra.mxu0 0.0
        %239 = vmatpush.msra.mxu0 0.0
        %240 = vmatpush.msra.mxu0 0.0
        %241 = vmatpush.msra.mxu0 0.0
        %242 = vmatpush.msra.mxu0 0.0
        %v243 = vand.u32 %v167, 4294901760
        %v244 = vsub.f32 %v167, %v243
        %245 = vmatpush.msra.mxu0 %v244
        %v246 = vand.u32 %v174, 4294901760
        %v247 = vsub.f32 %v174, %v246
        %248 = vmatmul.f32.gmra.mxu0 %v247
        %v249 = vpop.f32.mrf.mxu0
        %v250 = vadd.f32 %v226, %v249
        %251 = vdwg.mxu0
        %252 = vmatpush.msra.mxu0 0.0
        %253 = vmatpush.msra.mxu0 0.0
        %254 = vmatpush.msra.mxu0 0.0
        %255 = vmatpush.msra.mxu0 0.0
        %256 = vmatpush.msra.mxu0 0.0
        %257 = vmatpush.msra.mxu0 0.0
        %258 = vmatpush.msra.mxu0 0.0
        %259 = vmatpush.msra.mxu0 0.0
        %260 = vmatpush.msra.mxu0 0.0
        %261 = vmatpush.msra.mxu0 0.0
        %262 = vmatpush.msra.mxu0 0.0
        %263 = vmatpush.msra.mxu0 0.0
        %264 = vmatpush.msra.mxu0 0.0
        %265 = vmatpush.msra.mxu0 0.0
        %266 = vmatpush.msra.mxu0 0.0
        %v267 = vand.u32 %v167, 4294901760
        %268 = vmatpush.msra.mxu0 %v267
        %v269 = vand.u32 %v174, 4294901760
        %v270 = vsub.f32 %v174, %v269
        %v271 = vand.u32 %v270, 4294901760
        %272 = vmatmul.f32.gmra.mxu0 %v271
        %v273 = vpop.f32.mrf.mxu0
        %v274 = vadd.f32 %v250, %v273
        %275 = vdwg.mxu0
        %276 = vmatpush.msra.mxu0 0.0
        %277 = vmatpush.msra.mxu0 0.0
        %278 = vmatpush.msra.mxu0 0.0
        %279 = vmatpush.msra.mxu0 0.0
        %280 = vmatpush.msra.mxu0 0.0
        %281 = vmatpush.msra.mxu0 0.0
        %282 = vmatpush.msra.mxu0 0.0
        %283 = vmatpush.msra.mxu0 0.0
        %284 = vmatpush.msra.mxu0 0.0
        %285 = vmatpush.msra.mxu0 0.0
        %286 = vmatpush.msra.mxu0 0.0
        %287 = vmatpush.msra.mxu0 0.0
        %288 = vmatpush.msra.mxu0 0.0
        %289 = vmatpush.msra.mxu0 0.0
        %290 = vmatpush.msra.mxu0 0.0
        %v291 = vand.u32 %v167, 4294901760
        %v292 = vsub.f32 %v167, %v291
        %v293 = vand.u32 %v292, 4294901760
        %294 = vmatpush.msra.mxu0 %v293
        %v295 = vand.u32 %v174, 4294901760
        %296 = vmatmul.f32.gmra.mxu0 %v295
        %v297 = vpop.f32.mrf.mxu0
        %v298 = vadd.f32 %v274, %v297
        %299 = vdwg.mxu0
        %300 = vmatpush.msra.mxu0 0.0
        %301 = vmatpush.msra.mxu0 0.0
        %302 = vmatpush.msra.mxu0 0.0
        %303 = vmatpush.msra.mxu0 0.0
        %304 = vmatpush.msra.mxu0 0.0
        %305 = vmatpush.msra.mxu0 0.0
        %306 = vmatpush.msra.mxu0 0.0
        %307 = vmatpush.msra.mxu0 0.0
        %308 = vmatpush.msra.mxu0 0.0
        %309 = vmatpush.msra.mxu0 0.0
        %310 = vmatpush.msra.mxu0 0.0
        %311 = vmatpush.msra.mxu0 0.0
        %312 = vmatpush.msra.mxu0 0.0
        %313 = vmatpush.msra.mxu0 0.0
        %314 = vmatpush.msra.mxu0 0.0
        %v315 = vand.u32 %v167, 4294901760
        %316 = vmatpush.msra.mxu0 %v315
        %v317 = vand.u32 %v174, 4294901760
        %318 = vmatmul.f32.gmra.mxu0 %v317
        %v319 = vpop.f32.mrf.mxu0
        %v320 = vadd.f32 %v298, %v319
        %321 = vdwg.mxu0
        %vm322 = vcmask 261120
        %323 = vst.msk [vmem:[%s161] sm:$0xff] %vm322, %v320
        %s324 = sand.u32 %s93, 1
        %s325 = scalar_lea.sflag [#allocation3], %s324
        %s326 = sand.u32 %s93, 1
        %s327 = smul.addr %s326, 8
        %s328 = scalar_lea.vmem [#allocation2], %s327
        // Predicated region
        $region33: #{tpu_custom_call.1} parent=31 // pred_check
          %p329 = pneg %p103
        $region34: #{tpu_custom_call.1} parent=31 // pred_check_branch
          %331 = sbr.rel (%p329) target = $region36
        $region35: #{tpu_custom_call.1} parent=31 // pred_region
          %333 = vsyncadd %s325, 0
          %s334 = smul.addr %s17, 8
          %s335 = scalar_lea.hbm %s3, %s334
          %s337 = sshll.u32 %s328, 4
          %s338 = int_to_ptr.vmem [resolvable:$true] %s337
          %s339 = sshll.u32 %s335, 4
          %s340 = int_to_ptr.hbm [resolvable:$true] %s339
          %342 = dma.vmem_to_hbm [thread:$0]  %s338, 128, %s340, %s325
        $region36: #{tpu_custom_call.1} parent=31 // pred_fallthru
          _
      $region32: #{tpu_custom_call.1} parent=5 // pred_fallthru
        _
      %p343 = scmp.le.s32.totalorder 2, %s12
      // Predicated region
      $region37: #{tpu_custom_call.1} parent=5 // pred_check
        %p344 = pneg %p343
      $region38: #{tpu_custom_call.1} parent=5 // pred_check_branch
        %346 = sbr.rel (%p344) target = $region40
      $region39: #{tpu_custom_call.1} parent=5 // pred_region
        %s347 = ssub.s32 %s12, 2
        // Predicated region
        $region41: #{tpu_custom_call.1} parent=39 // pred_check
          %p348 = pneg %p109
        $region42: #{tpu_custom_call.1} parent=39 // pred_check_branch
          %350 = sbr.rel (%p348) target = $region44
        $region43: #{tpu_custom_call.1} parent=39 // pred_region
          %s351 = sand.u32 %s94, 1
          %s352 = scalar_lea.sflag [#allocation3], %s351
          %s353 = sand.u32 %s94, 1
          %s354 = smul.addr %s353, 8
          %s355 = scalar_lea.vmem [#allocation2], %s354
          %357 = dma.done %s352, 128
        $region44: #{tpu_custom_call.1} parent=39 // pred_fallthru
          _
      $region40: #{tpu_custom_call.1} parent=5 // pred_fallthru
        _
    $region6: #{tpu_custom_call.1} parent=1 // loop_footer
      %s16 = sadd.s32 1, %s12
    $region7: #{tpu_custom_call.1} parent=1 // loop_footer_branch
      %11 = sbr.rel target = $region3
    $region8: #{tpu_custom_call.1} parent=1 // loop_exit
      _
    %358 = vsyncpa [#allocation3], 1
    %s359 = scalar_lea.sflag [#allocation3], 1
    %360 = vsyncpa %s359, 1

</llo_original>
